<compile_context>
chip_gen: v5e
topology: v5e:2x2
jax: 0.10.0
libtpu: 0.0.40
codegen_flags: <defaults>
</compile_context>

<pallas_src>
import functools

import jax
import jax.numpy as jnp
import numpy as np
from jax import lax
from jax.experimental import pallas as pl
from jax.experimental.pallas import tpu as pltpu


_I32_MIN = -(2 ** 31)      # sentinel: strictly below every real sortable key
_I32_MAX = 2 ** 31 - 1     # canonical "NaN is largest" key


def _cdiv(a, b):
    return -(-a // b)


def _round_up(x, m):
    return ((x + m - 1) // m) * m


@functools.lru_cache(maxsize=None)
def _vmem_capacity_bytes():
    """Per-core VMEM capacity, with a conservative (v7x-sized) fallback."""
    try:
        info = pltpu.get_tpu_info()
        for name in ("vmem_capacity_bytes", "vmem_bytes"):
            val = getattr(info, name, None)
            if val:
                return int(val)
    except Exception:
        pass
    return 64 * 2 ** 20  # v7x per-TensorCore size: safe lower bound everywhere.


@functools.lru_cache(maxsize=None)
def _num_tensorcores():
    """Best-effort TensorCore-per-chip count (2 on v7x, 1 on v5e/v6e)."""
    try:
        info = pltpu.get_tpu_info()
    except Exception:
        return 1
    for name in ("num_tensorcores", "tensorcore_count", "num_cores",
                 "cores_per_chip", "num_cores_per_chip", "core_count"):
        val = getattr(info, name, None)
        if isinstance(val, int) and val > 0:
            return max(1, min(int(val), 2))
    try:
        if "7" in str(getattr(info, "chip_version", "")):
            return 2
    except Exception:
        pass
    return 1


def _tile_budget(in_itemsize, k, length):
    """(max elements per tile, vmem_limit_bytes) from the VMEM capacity."""
    vmem = _vmem_capacity_bytes()
    vmem_limit = max(32 * 2 ** 20, min(vmem * 3 // 4, 110 * 2 ** 20))
    # double-buffered input + i32 work copy + ~3 live full-tile i32 temps of
    # the round body + double-buffered output columns (k of `length`).
    out_per_elem = _cdiv(8 * k, max(length, 1))
    per_elem = 2 * in_itemsize + 4 + 12 + out_per_elem
    target_elems = max(8 * 128, vmem_limit // per_elem)
    return int(target_elems), int(vmem_limit)


def _min_grid_steps(total_bytes, num_cores):
    """Grid steps needed to use all TensorCores and overlap DMA, gated on size."""
    if num_cores <= 1:
        return 1
    if total_bytes >= 4 * num_cores * (2 << 20):   # tiles stay >= ~2 MiB each
        return 4 * num_cores
    if total_bytes >= num_cores * (1 << 20):       # >= ~1 MiB per core
        return num_cores
    return 1


def _kmax_kernel(x_ref, o_ref, *, k, red_axis, mode):
    """k rounds of exact integer-key max selection along `red_axis`.

    Matches torch.topk(..., sorted=True).values: descending order, duplicates
    kept, NaN treated as the largest value.
    """
    x = x_ref[...]
    length = x.shape[red_axis]
    neg = jnp.int32(_I32_MIN)

    # ---- one-time transform to monotone sortable int32 keys ----------------
    if mode == "packed_bf16":
        xf = x.astype(jnp.float32)                       # exact widening of bf16
        b = pltpu.bitcast(xf, jnp.int32)
        key = b ^ ((b >> 31) & jnp.int32(0x7FFFFFFF))    # float order -> int order
        key = jnp.where(jnp.isnan(xf), jnp.int32(_I32_MAX), key)   # NaN largest
        comp = (jnp.int32(length - 1)
                - lax.broadcasted_iota(jnp.int32, x.shape, red_axis))
        # sortable bf16 key in the high 16 bits, complemented index in the low
        # 16 bits -> keys are unique, so each round is 1 reduce + 1 select.
        work = (key & jnp.int32(-65536)) | comp
    elif mode == "float32":
        xf = x.astype(jnp.float32)                       # exact for <=32-bit floats
        b = pltpu.bitcast(xf, jnp.int32)
        work = b ^ ((b >> 31) & jnp.int32(0x7FFFFFFF))
        work = jnp.where(jnp.isnan(xf), jnp.int32(_I32_MAX), work)
    elif mode == "uint32":
        work = pltpu.bitcast(x, jnp.int32) ^ neg         # unsigned -> signed order
    else:  # "int32": int8/16/32, uint8/16, bool are exact in int32
        work = x.astype(jnp.int32)

    if mode != "packed_bf16":
        col = lax.broadcasted_iota(jnp.int32, x.shape, red_axis)

    # ---- k selection rounds -------------------------------------------------
    ridx = lax.broadcasted_iota(jnp.int32, o_ref.shape, red_axis)
    topk = jnp.full(o_ref.shape, neg, dtype=jnp.int32)
    # TODO(synk): for k > ~8, keep `work` in a VMEM scratch ref updated with
    # lax.fori_loop to bound live ranges; the unrolled loop is fine for small k.
    for r in range(k):
        m = jnp.max(work, axis=red_axis, keepdims=True)
        topk = jnp.where(ridx == r, m, topk)             # compose, store once later
        if r + 1 < k:
            if mode == "packed_bf16":
                work = jnp.where(work == m, neg, work)   # unique key -> 1 select
            else:
                # mask only the FIRST occurrence so duplicates are kept
                first = jnp.min(jnp.where(work == m, col, jnp.int32(length)),
                                axis=red_axis, keepdims=True)
                work = jnp.where(col == first, neg, work)

    # ---- decode keys back to the output dtype, single batched store --------
    if mode == "packed_bf16":
        key16 = topk >> 16                               # drop the index half
        bits16 = key16 ^ ((key16 >> 31) & jnp.int32(0x7FFF))
        vals = pltpu.bitcast(bits16 << 16, jnp.float32).astype(o_ref.dtype)
    elif mode == "float32":
        bits = topk ^ ((topk >> 31) & jnp.int32(0x7FFFFFFF))
        vals = pltpu.bitcast(bits, jnp.float32).astype(o_ref.dtype)
    elif mode == "uint32":
        vals = pltpu.bitcast(topk ^ neg, jnp.uint32)
    else:
        vals = topk.astype(o_ref.dtype)
    o_ref[...] = vals


def _kmax_last_axis(x2, k, mode, out_dtype):
    """Top-k over the last axis of a 2-D (R, L) view."""
    R, L = x2.shape
    itemsize = x2.dtype.itemsize
    target_elems, vmem_limit = _tile_budget(itemsize, k, L)
    num_cores = _num_tensorcores()

    tr_cap = max(8, (target_elems // max(L, 1)) // 8 * 8)
    tr = R if tr_cap >= R else tr_cap        # full-dim block or 8-aligned tiles
    steps = _min_grid_steps(R * L * itemsize, num_cores)
    if steps > 1:
        want = max(8, _round_up(_cdiv(R, steps), 8))
        if want < tr:
            tr = want
    grid = (_cdiv(R, tr),)

    kernel = functools.partial(_kmax_kernel, k=k, red_axis=1, mode=mode)
    return pl.pallas_call(
        kernel,
        out_shape=jax.ShapeDtypeStruct((R, k), out_dtype),
        grid=grid,
        in_specs=[pl.BlockSpec((tr, L), lambda i: (i, 0))],
        out_specs=pl.BlockSpec((tr, k), lambda i: (i, 0)),
        compiler_params=pltpu.CompilerParams(
            dimension_semantics=("parallel",),
            vmem_limit_bytes=vmem_limit),
    )(x2)


def _kmax_middle_axis(x3, k, mode, out_dtype):
    """Top-k over the middle axis of a 3-D (P, L, Q) view (no transpose)."""
    P, L, Q = x3.shape
    itemsize = x3.dtype.itemsize
    target_elems, vmem_limit = _tile_budget(itemsize, k, L)
    num_cores = _num_tensorcores()

    bq = Q if Q <= 1024 else 1024
    if L * bq > target_elems and Q > 128:
        bq = max(128, (target_elems // max(L, 1)) // 128 * 128)
    bp = max(1, min(P, target_elems // max(L * bq, 1)))

    # Enough grid steps to feed both v7x TensorCores and overlap DMA.
    min_steps = _min_grid_steps(P * L * Q * itemsize, num_cores)
    nq = _cdiv(Q, bq)
    if _cdiv(P, bp) * nq < min_steps:
        need_p = _cdiv(min_steps, nq)
        bp = max(1, min(bp, _cdiv(P, need_p)))
        if _cdiv(P, bp) * _cdiv(Q, bq) < min_steps and bq > 128:
            need_q = _cdiv(min_steps, _cdiv(P, bp))
            bq = max(128, (_cdiv(Q, need_q) // 128) * 128)

    grid = (_cdiv(P, bp), _cdiv(Q, bq))
    kernel = functools.partial(_kmax_kernel, k=k, red_axis=1, mode=mode)
    return pl.pallas_call(
        kernel,
        out_shape=jax.ShapeDtypeStruct((P, k, Q), out_dtype),
        grid=grid,
        in_specs=[pl.BlockSpec((bp, L, bq), lambda p, q: (p, 0, q))],
        out_specs=pl.BlockSpec((bp, k, bq), lambda p, q: (p, 0, q)),
        compiler_params=pltpu.CompilerParams(
            dimension_semantics=("parallel", "parallel"),
            vmem_limit_bytes=vmem_limit),
    )(x3)


def k_max_pooling(inputs, k, axis):
    """Values of the k largest entries along `axis`, sorted descending."""
    inputs = jnp.asarray(inputs)
    ndim = inputs.ndim
    if axis < 0 or axis >= ndim:
        raise ValueError('axis must be 0~%d,now is %d' % (ndim - 1, axis))
    if k < 1 or k > inputs.shape[axis]:
        raise ValueError('k must be in 1 ~ %d,now k is %d' % (inputs.shape[axis], k))

    dt = inputs.dtype
    shape = inputs.shape
    L = shape[axis]

    if dt.itemsize == 8:
        # TODO(synk): no exact 64-bit vector-compare path on TPU Pallas; use
        # XLA's top_k for f64/i64/u64 instead of silently truncating to 32 bit.
        moved = jnp.moveaxis(inputs, axis, -1)
        return jnp.moveaxis(lax.top_k(moved, k)[0], -1, axis)

    if dt == jnp.bool_:
        return k_max_pooling(inputs.astype(jnp.int32), k, axis).astype(jnp.bool_)

    if jnp.issubdtype(dt, jnp.floating):
        if dt == jnp.bfloat16 and L <= 65536:
            mode = "packed_bf16"   # single-reduce packed-key rounds
        else:
            # TODO(synk): float16 could also use a packed 16-bit key path.
            mode = "float32"       # exact sortable-int compares for f32/f16/f8
    elif dt == jnp.uint32:
        mode = "uint32"
    else:
        mode = "int32"             # int8/16/32, uint8/16 are exact in int32

    if axis == ndim - 1:
        lead = shape[:-1]
        R = int(np.prod(lead)) if lead else 1
        out2 = _kmax_last_axis(inputs.reshape(R, L), k, mode, dt)
        return out2.reshape(lead + (k,))

    Q = int(np.prod(shape[axis + 1:]))
    if Q >= 128:
        # Lane-dense middle-axis reduction: pure metadata reshape, no transpose.
        P = int(np.prod(shape[:axis])) if axis > 0 else 1
        out3 = _kmax_middle_axis(inputs.reshape(P, L, Q), k, mode, dt)
        return out3.reshape(shape[:axis] + (k,) + shape[axis + 1:])

    # Q < 128: a lane-sparse block would waste ~128/Q of every VPU pass, so pay
    # one XLA transpose and use the lane-dense last-axis kernel instead.
    moved = jnp.moveaxis(inputs, axis, -1)
    lead = moved.shape[:-1]
    R = int(np.prod(lead)) if lead else 1
    out2 = _kmax_last_axis(moved.reshape(R, L), k, mode, dt)
    return jnp.moveaxis(out2.reshape(lead + (k,)), -1, axis)


if __name__ == "__main__":
    key = jax.random.PRNGKey(0)
    # (batch_size, fields, embedding_dim) -- the shape family the funrec layer sees.
    x = jax.random.normal(key, (2, 4, 16), dtype=jnp.float32)

    # top-4 over the last (embedding) axis.
    out = jax.block_until_ready(k_max_pooling(x, k=4, axis=2))
    assert out.shape == (2, 4, 4), out.shape
    np.testing.assert_array_equal(np.asarray(out), np.asarray(jax.lax.top_k(x, 4)[0]))

    # top-3 over the fields axis (Q=16 < 128 -> lane-dense transpose fallback).
    out2 = jax.block_until_ready(k_max_pooling(x, k=3, axis=1))
    ref2 = jnp.moveaxis(jax.lax.top_k(jnp.moveaxis(x, 1, -1), 3)[0], -1, 1)
    np.testing.assert_array_equal(np.asarray(out2), np.asarray(ref2))

    # Odd sizes (partial row blocks), both layouts.
    y = jax.random.normal(jax.random.PRNGKey(1), (3, 37, 50), dtype=jnp.float32)
    out3 = jax.block_until_ready(k_max_pooling(y, k=5, axis=2))
    np.testing.assert_array_equal(np.asarray(out3), np.asarray(jax.lax.top_k(y, 5)[0]))
    out4 = jax.block_until_ready(k_max_pooling(y, k=4, axis=1))
    ref4 = jnp.moveaxis(jax.lax.top_k(jnp.moveaxis(y, 1, -1), 4)[0], -1, 1)
    np.testing.assert_array_equal(np.asarray(out4), np.asarray(ref4))

    # Wide trailing dim (Q >= 128) exercises the lane-dense middle-axis path.
    z = jax.random.normal(jax.random.PRNGKey(2), (2, 12, 160), dtype=jnp.float32)
    out5 = jax.block_until_ready(k_max_pooling(z, k=3, axis=1))
    ref5 = jnp.moveaxis(jax.lax.top_k(jnp.moveaxis(z, 1, -1), 3)[0], -1, 1)
    np.testing.assert_array_equal(np.asarray(out5), np.asarray(ref5))

    # bf16 uses the packed single-reduce key path (bit-exact).
    xb = x.astype(jnp.bfloat16)
    out6 = jax.block_until_ready(k_max_pooling(xb, k=4, axis=2))
    np.testing.assert_array_equal(np.asarray(out6),
                                  np.asarray(jax.lax.top_k(xb, 4)[0]))

    # int32 stays exact (integer compares).
    xi = jax.random.randint(jax.random.PRNGKey(3), (2, 4, 16),
                            -(2 ** 30), 2 ** 30, dtype=jnp.int32)
    out7 = jax.block_until_ready(k_max_pooling(xi, k=4, axis=2))
    np.testing.assert_array_equal(np.asarray(out7),
                                  np.asarray(jax.lax.top_k(xi, 4)[0]))

    # uint32 compares as unsigned (sign-bit flip), values >= 2^31 handled.
    xu = jax.random.bits(jax.random.PRNGKey(4), (2, 4, 16), dtype=jnp.uint32)
    out8 = jax.block_until_ready(k_max_pooling(xu, k=4, axis=2))
    ref8 = jnp.flip(jnp.sort(xu, axis=-1), axis=-1)[..., :4]
    np.testing.assert_array_equal(np.asarray(out8), np.asarray(ref8))

    print("KERNEL_OK")
</pallas_src>

<mosaic_0001>
module attributes {stable_mosaic.version = 11 : i64} {
  func.func @_kmax_kernel(%arg0: i32, %arg1: memref<8x16xf32, #tpu.memory_space<vmem>>, %arg2: memref<8x4xf32, #tpu.memory_space<vmem>>) attributes {dimension_semantics = [#tpu.dimension_semantics<parallel>], iteration_bounds = array<i64: 1>, scalar_prefetch = 0 : i64, scratch_operands = 0 : i64, tpu.core_type = #tpu.core_type<tc>, window_params = [{transform_indices = @transform_0, window_bounds = array<i64: 8, 16>}, {transform_indices = @transform_1, window_bounds = array<i64: 8, 4>}]} {
    %c0 = arith.constant 0 : index
    %c0_0 = arith.constant 0 : index
    %0 = vector.load %arg1[%c0, %c0_0] : memref<8x16xf32, #tpu.memory_space<vmem>>, vector<8x16xf32>
    %1 = tpu.bitcast %0 : vector<8x16xf32> -> vector<8x16xi32>
    %c31_i32 = arith.constant 31 : i32
    %2 = vector.broadcast %c31_i32 : i32 to vector<8x16xi32>
    %3 = arith.shrsi %1, %2 : vector<8x16xi32>
    %c2147483647_i32 = arith.constant 2147483647 : i32
    %4 = vector.broadcast %c2147483647_i32 : i32 to vector<8x16xi32>
    %5 = arith.andi %3, %4 : vector<8x16xi32>
    %6 = arith.xori %1, %5 : vector<8x16xi32>
    %7 = arith.cmpf one, %0, %0 : vector<8x16xf32>
    %c2147483647_i32_1 = arith.constant 2147483647 : i32
    %8 = vector.broadcast %c2147483647_i32_1 : i32 to vector<8x16xi32>
    %9 = arith.select %7, %8, %6 : vector<8x16xi1>, vector<8x16xi32>
    %10 = tpu.iota {dimensions = array<i32: 1>} : vector<8x16xi32>
    %11 = tpu.iota {dimensions = array<i32: 1>} : vector<8x4xi32>
    %c-2147483648_i32 = arith.constant -2147483648 : i32
    %12 = vector.broadcast %c-2147483648_i32 : i32 to vector<8x4xi32>
    %cst = arith.constant dense<-2147483648> : vector<8xi32>
    %13 = vector.multi_reduction <maxsi>, %9, %cst [1] : vector<8x16xi32> to vector<8xi32>
    %14 = vector.shape_cast %13 : vector<8xi32> to vector<8x1xi32>
    %c0_i32 = arith.constant 0 : i32
    %15 = vector.broadcast %c0_i32 : i32 to vector<8x4xi32>
    %16 = arith.cmpi eq, %11, %15 : vector<8x4xi32>
    %17 = vector.shape_cast %14 : vector<8x1xi32> to vector<8x1xi32>
    %18 = vector.broadcast %17 : vector<8x1xi32> to vector<8x4xi32>
    %19 = arith.select %16, %18, %12 : vector<8x4xi1>, vector<8x4xi32>
    %20 = vector.broadcast %14 : vector<8x1xi32> to vector<8x16xi32>
    %21 = arith.cmpi eq, %9, %20 : vector<8x16xi32>
    %c16_i32 = arith.constant 16 : i32
    %22 = vector.broadcast %c16_i32 : i32 to vector<8x16xi32>
    %23 = arith.select %21, %10, %22 : vector<8x16xi1>, vector<8x16xi32>
    %cst_2 = arith.constant dense<2147483647> : vector<8xi32>
    %24 = vector.multi_reduction <minsi>, %23, %cst_2 [1] : vector<8x16xi32> to vector<8xi32>
    %25 = vector.shape_cast %24 : vector<8xi32> to vector<8x1xi32>
    %26 = vector.broadcast %25 : vector<8x1xi32> to vector<8x16xi32>
    %27 = arith.cmpi eq, %10, %26 : vector<8x16xi32>
    %c-2147483648_i32_3 = arith.constant -2147483648 : i32
    %28 = vector.broadcast %c-2147483648_i32_3 : i32 to vector<8x16xi32>
    %29 = arith.select %27, %28, %9 : vector<8x16xi1>, vector<8x16xi32>
    %cst_4 = arith.constant dense<-2147483648> : vector<8xi32>
    %30 = vector.multi_reduction <maxsi>, %29, %cst_4 [1] : vector<8x16xi32> to vector<8xi32>
    %31 = vector.shape_cast %30 : vector<8xi32> to vector<8x1xi32>
    %c1_i32 = arith.constant 1 : i32
    %32 = vector.broadcast %c1_i32 : i32 to vector<8x4xi32>
    %33 = arith.cmpi eq, %11, %32 : vector<8x4xi32>
    %34 = vector.shape_cast %31 : vector<8x1xi32> to vector<8x1xi32>
    %35 = vector.broadcast %34 : vector<8x1xi32> to vector<8x4xi32>
    %36 = arith.select %33, %35, %19 : vector<8x4xi1>, vector<8x4xi32>
    %37 = vector.broadcast %31 : vector<8x1xi32> to vector<8x16xi32>
    %38 = arith.cmpi eq, %29, %37 : vector<8x16xi32>
    %c16_i32_5 = arith.constant 16 : i32
    %39 = vector.broadcast %c16_i32_5 : i32 to vector<8x16xi32>
    %40 = arith.select %38, %10, %39 : vector<8x16xi1>, vector<8x16xi32>
    %cst_6 = arith.constant dense<2147483647> : vector<8xi32>
    %41 = vector.multi_reduction <minsi>, %40, %cst_6 [1] : vector<8x16xi32> to vector<8xi32>
    %42 = vector.shape_cast %41 : vector<8xi32> to vector<8x1xi32>
    %43 = vector.broadcast %42 : vector<8x1xi32> to vector<8x16xi32>
    %44 = arith.cmpi eq, %10, %43 : vector<8x16xi32>
    %c-2147483648_i32_7 = arith.constant -2147483648 : i32
    %45 = vector.broadcast %c-2147483648_i32_7 : i32 to vector<8x16xi32>
    %46 = arith.select %44, %45, %29 : vector<8x16xi1>, vector<8x16xi32>
    %cst_8 = arith.constant dense<-2147483648> : vector<8xi32>
    %47 = vector.multi_reduction <maxsi>, %46, %cst_8 [1] : vector<8x16xi32> to vector<8xi32>
    %48 = vector.shape_cast %47 : vector<8xi32> to vector<8x1xi32>
    %c2_i32 = arith.constant 2 : i32
    %49 = vector.broadcast %c2_i32 : i32 to vector<8x4xi32>
    %50 = arith.cmpi eq, %11, %49 : vector<8x4xi32>
    %51 = vector.shape_cast %48 : vector<8x1xi32> to vector<8x1xi32>
    %52 = vector.broadcast %51 : vector<8x1xi32> to vector<8x4xi32>
    %53 = arith.select %50, %52, %36 : vector<8x4xi1>, vector<8x4xi32>
    %54 = vector.broadcast %48 : vector<8x1xi32> to vector<8x16xi32>
    %55 = arith.cmpi eq, %46, %54 : vector<8x16xi32>
    %c16_i32_9 = arith.constant 16 : i32
    %56 = vector.broadcast %c16_i32_9 : i32 to vector<8x16xi32>
    %57 = arith.select %55, %10, %56 : vector<8x16xi1>, vector<8x16xi32>
    %cst_10 = arith.constant dense<2147483647> : vector<8xi32>
    %58 = vector.multi_reduction <minsi>, %57, %cst_10 [1] : vector<8x16xi32> to vector<8xi32>
    %59 = vector.shape_cast %58 : vector<8xi32> to vector<8x1xi32>
    %60 = vector.broadcast %59 : vector<8x1xi32> to vector<8x16xi32>
    %61 = arith.cmpi eq, %10, %60 : vector<8x16xi32>
    %c-2147483648_i32_11 = arith.constant -2147483648 : i32
    %62 = vector.broadcast %c-2147483648_i32_11 : i32 to vector<8x16xi32>
    %63 = arith.select %61, %62, %46 : vector<8x16xi1>, vector<8x16xi32>
    %cst_12 = arith.constant dense<-2147483648> : vector<8xi32>
    %64 = vector.multi_reduction <maxsi>, %63, %cst_12 [1] : vector<8x16xi32> to vector<8xi32>
    %65 = vector.shape_cast %64 : vector<8xi32> to vector<8x1xi32>
    %c3_i32 = arith.constant 3 : i32
    %66 = vector.broadcast %c3_i32 : i32 to vector<8x4xi32>
    %67 = arith.cmpi eq, %11, %66 : vector<8x4xi32>
    %68 = vector.shape_cast %65 : vector<8x1xi32> to vector<8x1xi32>
    %69 = vector.broadcast %68 : vector<8x1xi32> to vector<8x4xi32>
    %70 = arith.select %67, %69, %53 : vector<8x4xi1>, vector<8x4xi32>
    %c31_i32_13 = arith.constant 31 : i32
    %71 = vector.broadcast %c31_i32_13 : i32 to vector<8x4xi32>
    %72 = arith.shrsi %70, %71 : vector<8x4xi32>
    %c2147483647_i32_14 = arith.constant 2147483647 : i32
    %73 = vector.broadcast %c2147483647_i32_14 : i32 to vector<8x4xi32>
    %74 = arith.andi %72, %73 : vector<8x4xi32>
    %75 = arith.xori %70, %74 : vector<8x4xi32>
    %76 = tpu.bitcast %75 : vector<8x4xi32> -> vector<8x4xf32>
    %c0_15 = arith.constant 0 : index
    %c0_16 = arith.constant 0 : index
    %77 = vector.load %arg2[%c0_15, %c0_16] : memref<8x4xf32, #tpu.memory_space<vmem>>, vector<8x4xf32>
    tpu.vector_store %arg2[%c0_15, %c0_16], %76 {strides = array<i32>} : memref<8x4xf32, #tpu.memory_space<vmem>>, vector<8x4xf32>,
    return
  }
  func.func @transform_0(%arg0: i32) -> (i32, i32) {
    %c0_i32 = arith.constant 0 : i32
    %c0_i32_0 = arith.constant 0 : i32
    return %arg0, %c0_i32 : i32, i32
  }
  func.func @transform_1(%arg0: i32) -> (i32, i32) {
    %c0_i32 = arith.constant 0 : i32
    %c0_i32_0 = arith.constant 0 : i32
    return %arg0, %c0_i32 : i32, i32
  }
}

</mosaic_0001>

<llo_original>
// kernel: tpu_custom_call.1
$region0: #{tpu_custom_call.1}
  #allocation0 [shape = 'u32[]', space=smem, size = 0x4, offset = 0x4, fixed_abs, tag = 'smem constant byte address 0x4 - core index']
  #allocation1 [shape = 'u32[72,128]{1,0:T(1,128)}', space=vmem, size = 0x9000, scoped, tag = 'internal scratch']
  %s0 = inlined_call_operand.hbm [shape: f32[8,16], index: 0, kind: input, shape index: {}]
  %s1 = inlined_call_operand.vmem [shape: f32[8,4], index: 1, kind: output, shape index: {}]
  %s2 = sld [smem:[#allocation0]]
  $region18: #{tpu_custom_call.1} parent=0
    _
  %s4 = ssub.s32 1, %s2
  %s5 = scalar_select 0, %s4, %s2
  $region1: #{tpu_custom_call.1} parent=0
    #allocation2 [shape = 'u8[4096]{0}', space=vmem, size = 0x1000, scoped, tag = 'input window, operand 0, single buffered']
    #allocation3 [shape = 's32[1]{0}', space=sflag, size = 0x4, scoped, tag = 'scoped memory for tpu_custom_call.1']
    %6 = vsyncpa [#allocation3], 0
    // Predicated region
    $region2: #{tpu_custom_call.1} parent=1 // pred_check
      _
    $region3: #{tpu_custom_call.1} parent=1 // pred_check_branch
      %8 = sbr.rel (0) target = $region5
    $region4: #{tpu_custom_call.1} parent=1 // pred_region
      %10 = vsyncadd [#allocation3], 0
      %s12 = sshll.u32 %s0, 4
      %s13 = int_to_ptr.hbm [resolvable:$true] %s12
      %s14 = sshll.u32 [#allocation2], 4
      %s15 = int_to_ptr.vmem [resolvable:$true] %s14
      %17 = dma.hbm_to_vmem [thread:$0]  %s13, 128, %s15, [#allocation3]
    $region5: #{tpu_custom_call.1} parent=1 // pred_fallthru
      _
    // Predicated region
    $region6: #{tpu_custom_call.1} parent=1 // pred_check
      _
    $region7: #{tpu_custom_call.1} parent=1 // pred_check_branch
      %19 = sbr.rel (0) target = $region9
    $region8: #{tpu_custom_call.1} parent=1 // pred_region
      %21 = dma.done [#allocation3], 128
    $region9: #{tpu_custom_call.1} parent=1 // pred_fallthru
      _
    %v22 = vld [vmem:[#allocation2] sm:$0xff]
    %v24 = vshra.s32 %v22, 31
    %v25 = vand.u32 %v24, 2147483647
    %v26 = vxor.u32 %v22, %v25
    %vm27 = vcmp.ne.f32.partialorder %v22, %v22
    %v28 = vsel %vm27, 2147483647, %v26
    %v29 = vlaneseq
    %v30 = vand.u32 %v29, 127
    %vm31 = vcmask 130048
    %v32 = vsel %vm31, %v28, 2147483648
    %v33 = vand.u32 %v32, 65535
    %v34 = vshra.s32 %v32, 16
    %v35 = vcvt.s32.f32 %v33
    %v36 = vcvt.s32.f32 %v34
    %37 = vmax.xlane.f32.xlu0 %v36
    %v38 = vpop.xlane.xlu0 %37
    %vm39 = vcmp.eq.f32.partialorder %v36, %v38
    %v40 = vsel %vm39, %v35, -inf
    %41 = vmax.xlane.f32.xlu0 %v40
    %v42 = vpop.xlane.xlu0 %41
    %v43 = vcvt.f32.s32 %v42
    %v44 = vcvt.f32.s32 %v38
    %v45 = vshll.u32 %v44, 16
    %v46 = vadd.s32 %v45, %v43
    %vm47 = vcmp.eq.s32.totalorder %v30, 0
    %v48 = vsel %vm47, %v46, 2147483648
    %vm49 = vcmp.eq.s32.totalorder %v28, %v46
    %v50 = vsel %vm49, %v30, 16
    %v51 = vsel %vm31, %v50, 2147483647
    %v52 = vand.u32 %v51, 65535
    %v53 = vshra.s32 %v51, 16
    %v54 = vcvt.s32.f32 %v52
    %v55 = vcvt.s32.f32 %v53
    %56 = vmin.xlane.f32.xlu0 %v55
    %v57 = vpop.xlane.xlu0 %56
    %vm58 = vcmp.eq.f32.partialorder %v55, %v57
    %v59 = vsel %vm58, %v54, inf
    %60 = vmin.xlane.f32.xlu0 %v59
    %v61 = vpop.xlane.xlu0 %60
    %v62 = vcvt.f32.s32 %v61
    %v63 = vcvt.f32.s32 %v57
    %v64 = vshll.u32 %v63, 16
    %v65 = vadd.s32 %v64, %v62
    %vm66 = vcmp.eq.s32.totalorder %v30, %v65
    %v67 = vsel %vm66, 2147483648, %v28
    %v68 = vsel %vm31, %v67, 2147483648
    %v69 = vand.u32 %v68, 65535
    %v70 = vshra.s32 %v68, 16
    %v71 = vcvt.s32.f32 %v69
    %v72 = vcvt.s32.f32 %v70
    %73 = vmax.xlane.f32.xlu0 %v72
    %v74 = vpop.xlane.xlu0 %73
    %vm75 = vcmp.eq.f32.partialorder %v72, %v74
    %v76 = vsel %vm75, %v71, -inf
    %77 = vmax.xlane.f32.xlu0 %v76
    %v78 = vpop.xlane.xlu0 %77
    %v79 = vcvt.f32.s32 %v78
    %v80 = vcvt.f32.s32 %v74
    %v81 = vshll.u32 %v80, 16
    %v82 = vadd.s32 %v81, %v79
    %vm83 = vcmp.eq.s32.totalorder %v30, 1
    %v84 = vsel %vm83, %v82, %v48
    %vm85 = vcmp.eq.s32.totalorder %v67, %v82
    %v86 = vsel %vm85, %v30, 16
    %v87 = vsel %vm31, %v86, 2147483647
    %v88 = vand.u32 %v87, 65535
    %v89 = vshra.s32 %v87, 16
    %v90 = vcvt.s32.f32 %v88
    %v91 = vcvt.s32.f32 %v89
    %92 = vmin.xlane.f32.xlu0 %v91
    %v93 = vpop.xlane.xlu0 %92
    %vm94 = vcmp.eq.f32.partialorder %v91, %v93
    %v95 = vsel %vm94, %v90, inf
    %96 = vmin.xlane.f32.xlu0 %v95
    %v97 = vpop.xlane.xlu0 %96
    %v98 = vcvt.f32.s32 %v97
    %v99 = vcvt.f32.s32 %v93
    %v100 = vshll.u32 %v99, 16
    %v101 = vadd.s32 %v100, %v98
    %vm102 = vcmp.eq.s32.totalorder %v30, %v101
    %v103 = vsel %vm102, 2147483648, %v67
    %v104 = vsel %vm31, %v103, 2147483648
    %v105 = vand.u32 %v104, 65535
    %v106 = vshra.s32 %v104, 16
    %v107 = vcvt.s32.f32 %v105
    %v108 = vcvt.s32.f32 %v106
    %109 = vmax.xlane.f32.xlu0 %v108
    %v110 = vpop.xlane.xlu0 %109
    %vm111 = vcmp.eq.f32.partialorder %v108, %v110
    %v112 = vsel %vm111, %v107, -inf
    %113 = vmax.xlane.f32.xlu0 %v112
    %v114 = vpop.xlane.xlu0 %113
    %v115 = vcvt.f32.s32 %v114
    %v116 = vcvt.f32.s32 %v110
    %v117 = vshll.u32 %v116, 16
    %v118 = vadd.s32 %v117, %v115
    %vm119 = vcmp.eq.s32.totalorder %v30, 2
    %v120 = vsel %vm119, %v118, %v84
    %vm121 = vcmp.eq.s32.totalorder %v103, %v118
    %v122 = vsel %vm121, %v30, 16
    %v123 = vsel %vm31, %v122, 2147483647
    %v124 = vand.u32 %v123, 65535
    %v125 = vshra.s32 %v123, 16
    %v126 = vcvt.s32.f32 %v124
    %v127 = vcvt.s32.f32 %v125
    %128 = vmin.xlane.f32.xlu0 %v127
    %v129 = vpop.xlane.xlu0 %128
    %vm130 = vcmp.eq.f32.partialorder %v127, %v129
    %v131 = vsel %vm130, %v126, inf
    %132 = vmin.xlane.f32.xlu0 %v131
    %v133 = vpop.xlane.xlu0 %132
    %v134 = vcvt.f32.s32 %v133
    %v135 = vcvt.f32.s32 %v129
    %v136 = vshll.u32 %v135, 16
    %v137 = vadd.s32 %v136, %v134
    %vm138 = vcmp.eq.s32.totalorder %v30, %v137
    %v139 = vsel %vm138, 2147483648, %v103
    %v140 = vsel %vm31, %v139, 2147483648
    %v141 = vand.u32 %v140, 65535
    %v142 = vshra.s32 %v140, 16
    %v143 = vcvt.s32.f32 %v141
    %v144 = vcvt.s32.f32 %v142
    %145 = vmax.xlane.f32.xlu0 %v144
    %v146 = vpop.xlane.xlu0 %145
    %vm147 = vcmp.eq.f32.partialorder %v144, %v146
    %v148 = vsel %vm147, %v143, -inf
    %149 = vmax.xlane.f32.xlu0 %v148
    %v150 = vpop.xlane.xlu0 %149
    %v151 = vcvt.f32.s32 %v150
    %v152 = vcvt.f32.s32 %v146
    %v153 = vshll.u32 %v152, 16
    %v154 = vadd.s32 %v153, %v151
    %vm155 = vcmp.eq.s32.totalorder %v30, 3
    %v156 = vsel %vm155, %v154, %v120
    %v157 = vshra.s32 %v156, 31
    %v158 = vand.u32 %v157, 2147483647
    %v159 = vxor.u32 %v156, %v158
    %vm161 = vcmask 31744
    %162 = vst.msk [vmem:[%s1] sm:$0xff] %vm161, %v159
    // Predicated region
    $region10: #{tpu_custom_call.1} parent=1 // pred_check
      _
    $region11: #{tpu_custom_call.1} parent=1 // pred_check_branch
      %164 = sbr.rel (0) target = $region13
    $region12: #{tpu_custom_call.1} parent=1 // pred_region
      _
    $region13: #{tpu_custom_call.1} parent=1 // pred_fallthru
      _
    // Predicated region
    $region14: #{tpu_custom_call.1} parent=1 // pred_check
      _
    $region15: #{tpu_custom_call.1} parent=1 // pred_check_branch
      %166 = sbr.rel (0) target = $region17
    $region16: #{tpu_custom_call.1} parent=1 // pred_region
      _
    $region17: #{tpu_custom_call.1} parent=1 // pred_fallthru
      _
    %167 = vsyncpa [#allocation3], 1

</llo_original>
